<compile_context>
chip_gen: v6e
topology: v6e:2x2x1
jax: 0.10.0
libtpu: 0.0.40
codegen_flags: <defaults>
</compile_context>

<pallas_src>
import jax
import jax.numpy as jnp
from jax.experimental import pallas as pl
from jax.experimental.pallas import tpu as pltpu

# ---------------- problem sizes (small, synthetic) ----------------
B = 4            # graphs, folded into one block-diagonal big graph
N = 32           # nodes per graph
BN = B * N       # 128 total nodes
C_IN = 8         # num_channels_in
C_OUT = 16       # num_channels_out
E = 64           # edges per graph
LANE = 128       # TPU lane width
C_OUT_PAD = LANE # output padded to lane-dense stores
NUM_ROW_BLOCKS = 2   # 2 "parallel" row blocks -> both v7x TensorCores busy
ACTIVATION = "relu"


def sageconv_kernel(a_ref, x_full_ref, x_self_ref, wl_ref, wr_ref, b_ref, o_ref):
    """One row block of the folded (block-diagonal) graph per grid step.

    a_ref:      [TM, BN]        row block of row-normalized mean adjacency A[dst, src]
    x_full_ref: [BN, C_IN]      all node features (aggregation operand)
    x_self_ref: [TM, C_IN]      this row block's node features (root/self operand)
    wl_ref:     [C_IN, C_OUT_PAD]  lin_l weight, zero-padded on output lanes only
    wr_ref:     [C_IN, C_OUT_PAD]  lin_r weight, zero-padded on output lanes only
    b_ref:      [1, C_OUT_PAD]     lin_l bias, zero-padded
    o_ref:      [TM, C_OUT_PAD]    lane-dense output block (sliced to C_OUT outside)
    """
    # mean aggregation over incoming edges: neigh[dst] = mean_src x[src]
    neigh = jnp.dot(a_ref[...], x_full_ref[...], preferred_element_type=jnp.float32)
    # projection: two dots accumulate on the MXU result path (no concat, K = C_IN)
    out = jnp.dot(neigh, wl_ref[...], preferred_element_type=jnp.float32)
    out = out + jnp.dot(x_self_ref[...], wr_ref[...], preferred_element_type=jnp.float32)
    out = out + b_ref[...]                      # bias broadcast over nodes
    if ACTIVATION == "relu":
        out = jnp.maximum(out, 0.0)
    o_ref[...] = out.astype(o_ref.dtype)


def prepare_params(w_l, w_r, bias):
    """One-time parameter layout prep (hoisted out of the forward path)."""
    c_in, c_out = w_l.shape
    w_l_pad = jnp.zeros((c_in, C_OUT_PAD), jnp.float32).at[:, :c_out].set(w_l)
    w_r_pad = jnp.zeros((c_in, C_OUT_PAD), jnp.float32).at[:, :c_out].set(w_r)
    bias_pad = jnp.zeros((1, C_OUT_PAD), jnp.float32).at[:, :c_out].set(bias)
    return w_l_pad, w_r_pad, bias_pad


def sageconv_forward(a, x, w_l_pad, w_r_pad, bias_pad, c_out):
    """SAGEConv forward on the folded graph. Returns [BN, C_OUT] (un-padded)."""
    bn, c_in = x.shape
    tm = bn // NUM_ROW_BLOCKS                   # 64-row blocks (multiple of N and of 8)

    out_pad = pl.pallas_call(
        sageconv_kernel,
        out_shape=jax.ShapeDtypeStruct((bn, C_OUT_PAD), jnp.float32),
        grid_spec=pl.GridSpec(
            grid=(NUM_ROW_BLOCKS,),
            in_specs=[
                pl.BlockSpec((tm, bn), lambda i: (i, 0)),          # A row block
                pl.BlockSpec((bn, c_in), lambda i: (0, 0)),        # X (all nodes)
                pl.BlockSpec((tm, c_in), lambda i: (i, 0)),        # X (this row block)
                pl.BlockSpec((c_in, C_OUT_PAD), lambda i: (0, 0)),  # W_l (shared)
                pl.BlockSpec((c_in, C_OUT_PAD), lambda i: (0, 0)),  # W_r (shared)
                pl.BlockSpec((1, C_OUT_PAD), lambda i: (0, 0)),    # bias (shared)
            ],
            out_specs=pl.BlockSpec((tm, C_OUT_PAD), lambda i: (i, 0)),
        ),
        compiler_params=pltpu.CompilerParams(
            dimension_semantics=("parallel",)),   # row blocks shard across TCs (v7x)
    )(a, x, x, w_l_pad, w_r_pad, bias_pad)

    return out_pad[:, :c_out]
    # TODO(synk): for large graphs where the dense [BN, BN] f32 adjacency no longer
    # fits VMEM (on v7x the scoped default is 32 MiB and BlockSpec double-buffers each
    # input, so a resident A blows the budget around BN ~ 2k), tile N_dst (parallel) x
    # N_src (arbitrary, last) at ~512x512 with an f32 accumulator scratch and set
    # vmem_limit_bytes explicitly.


def build_mean_adjacency(src, dst, num_nodes):
    """Dense row-normalized adjacency for mean aggregation. Plain-JAX glue.

    A[dst, src] = (#edges src->dst) / in_degree(dst); rows with no incoming edges are
    zero, matching PyG mean aggregation (isolated nodes aggregate to zero).
    """
    deg = jnp.zeros((num_nodes,), jnp.float32).at[dst].add(1.0)
    a = jnp.zeros((num_nodes, num_nodes), jnp.float32).at[dst, src].add(1.0)
    inv_deg = jnp.where(deg > 0, 1.0 / deg, 0.0)
    return a * inv_deg[:, None]


def reference_forward(a_mean, x, w_l, w_r, bias):
    """Pure-JAX reference on the folded graph."""
    neigh = a_mean @ x
    out = neigh @ w_l + x @ w_r + bias
    return jnp.maximum(out, 0.0)


if __name__ == "__main__":
    key = jax.random.PRNGKey(0)
    k_x, k_src, k_dst, k_ew, k_wl, k_wr, k_b = jax.random.split(key, 7)

    # --- synthetic batched graph data ---
    x_batch = jax.random.normal(k_x, (B, N, C_IN), dtype=jnp.float32)
    src = jax.random.randint(k_src, (B, E), 0, N, dtype=jnp.int32)
    dst = jax.random.randint(k_dst, (B, E), 0, N, dtype=jnp.int32)
    # data.edge_attr exists in the PyTorch module's Data object but SAGEConv ignores it.
    edge_attr = jnp.abs(jax.random.normal(k_ew, (B, E))) + 0.1  # unused by SAGEConv

    # --- deterministic parameter init (lin_l with bias, lin_r without) ---
    limit = (1.0 / C_IN) ** 0.5
    w_l = jax.random.uniform(k_wl, (C_IN, C_OUT), minval=-limit, maxval=limit,
                             dtype=jnp.float32)
    w_r = jax.random.uniform(k_wr, (C_IN, C_OUT), minval=-limit, maxval=limit,
                             dtype=jnp.float32)
    bias = jax.random.uniform(k_b, (1, C_OUT), minval=-limit, maxval=limit,
                              dtype=jnp.float32)

    # --- fold the batch: block-diagonal big graph (node indices offset per graph,
    #     so off-diagonal blocks are exactly zero and graphs cannot leak) ---
    offsets = (jnp.arange(B, dtype=jnp.int32) * N)[:, None]
    g_src = (src + offsets).reshape(-1)
    g_dst = (dst + offsets).reshape(-1)
    a_big = build_mean_adjacency(g_src, g_dst, BN)          # [BN, BN], block-diagonal
    x_big = x_batch.reshape(BN, C_IN)                       # [BN, C_IN]

    # --- one-time parameter layout prep (off the per-forward critical path) ---
    w_l_pad, w_r_pad, bias_pad = prepare_params(w_l, w_r, bias)

    # --- run Pallas kernel (one call, 2 parallel row blocks) ---
    out = sageconv_forward(a_big, x_big, w_l_pad, w_r_pad, bias_pad, C_OUT)
    out = jax.block_until_ready(out)

    # --- sanity check against pure-JAX reference ---
    ref = reference_forward(a_big, x_big, w_l, w_r, bias)
    assert out.shape == (BN, C_OUT)
    assert jnp.allclose(out, ref, atol=1e-4, rtol=1e-4), "mismatch vs reference"

    # per-graph view, matching the PyTorch module's [num_nodes, C_OUT] per graph
    out_per_graph = out.reshape(B, N, C_OUT)
    assert out_per_graph.shape == (B, N, C_OUT)

    print("KERNEL_OK")
</pallas_src>

<mosaic_0001>
module attributes {stable_mosaic.version = 11 : i64} {
  func.func @sageconv_kernel(%arg0: i32, %arg1: memref<64x128xf32, #tpu.memory_space<vmem>>, %arg2: memref<128x8xf32, #tpu.memory_space<vmem>>, %arg3: memref<64x8xf32, #tpu.memory_space<vmem>>, %arg4: memref<8x128xf32, #tpu.memory_space<vmem>>, %arg5: memref<8x128xf32, #tpu.memory_space<vmem>>, %arg6: memref<1x128xf32, #tpu.memory_space<vmem>>, %arg7: memref<64x128xf32, #tpu.memory_space<vmem>>) attributes {dimension_semantics = [#tpu.dimension_semantics<parallel>], iteration_bounds = array<i64: 2>, scalar_prefetch = 0 : i64, scratch_operands = 0 : i64, tpu.core_type = #tpu.core_type<tc>, window_params = [{transform_indices = @transform_0, window_bounds = array<i64: 64, 128>}, {pipeline_mode = #tpu.pipeline_mode<synchronous>, transform_indices = @transform_1, window_bounds = array<i64: 128, 8>}, {transform_indices = @transform_2, window_bounds = array<i64: 64, 8>}, {pipeline_mode = #tpu.pipeline_mode<synchronous>, transform_indices = @transform_3, window_bounds = array<i64: 8, 128>}, {pipeline_mode = #tpu.pipeline_mode<synchronous>, transform_indices = @transform_4, window_bounds = array<i64: 8, 128>}, {pipeline_mode = #tpu.pipeline_mode<synchronous>, transform_indices = @transform_5, window_bounds = array<i64: 1, 128>}, {transform_indices = @transform_6, window_bounds = array<i64: 64, 128>}]} {
    %c0 = arith.constant 0 : index
    %c0_0 = arith.constant 0 : index
    %0 = vector.load %arg1[%c0, %c0_0] : memref<64x128xf32, #tpu.memory_space<vmem>>, vector<64x128xf32>
    %c0_1 = arith.constant 0 : index
    %c0_2 = arith.constant 0 : index
    %1 = vector.load %arg2[%c0_1, %c0_2] : memref<128x8xf32, #tpu.memory_space<vmem>>, vector<128x8xf32>
    %cst = arith.constant dense<0.000000e+00> : vector<64x8xf32>
    %2 = tpu.matmul %0, %1, %cst {dimension_numbers = #tpu.dot_dimension_numbers<[1], [0], [0], [1], [0, 0, 1, 1], [], []>} : vector<64x128xf32>, vector<128x8xf32>, vector<64x8xf32> -> vector<64x8xf32>
    %c0_3 = arith.constant 0 : index
    %c0_4 = arith.constant 0 : index
    %3 = vector.load %arg4[%c0_3, %c0_4] : memref<8x128xf32, #tpu.memory_space<vmem>>, vector<8x128xf32>
    %cst_5 = arith.constant dense<0.000000e+00> : vector<64x128xf32>
    %4 = tpu.matmul %2, %3, %cst_5 {dimension_numbers = #tpu.dot_dimension_numbers<[1], [0], [0], [1], [0, 0, 1, 1], [], []>} : vector<64x8xf32>, vector<8x128xf32>, vector<64x128xf32> -> vector<64x128xf32>
    %c0_6 = arith.constant 0 : index
    %c0_7 = arith.constant 0 : index
    %5 = vector.load %arg3[%c0_6, %c0_7] : memref<64x8xf32, #tpu.memory_space<vmem>>, vector<64x8xf32>
    %c0_8 = arith.constant 0 : index
    %c0_9 = arith.constant 0 : index
    %6 = vector.load %arg5[%c0_8, %c0_9] : memref<8x128xf32, #tpu.memory_space<vmem>>, vector<8x128xf32>
    %cst_10 = arith.constant dense<0.000000e+00> : vector<64x128xf32>
    %7 = tpu.matmul %5, %6, %cst_10 {dimension_numbers = #tpu.dot_dimension_numbers<[1], [0], [0], [1], [0, 0, 1, 1], [], []>} : vector<64x8xf32>, vector<8x128xf32>, vector<64x128xf32> -> vector<64x128xf32>
    %8 = arith.addf %4, %7 : vector<64x128xf32>
    %c0_11 = arith.constant 0 : index
    %c0_12 = arith.constant 0 : index
    %9 = vector.load %arg6[%c0_11, %c0_12] : memref<1x128xf32, #tpu.memory_space<vmem>>, vector<1x128xf32>
    %10 = vector.broadcast %9 : vector<1x128xf32> to vector<64x128xf32>
    %11 = arith.addf %8, %10 : vector<64x128xf32>
    %cst_13 = arith.constant 0.000000e+00 : f32
    %12 = vector.broadcast %cst_13 : f32 to vector<64x128xf32>
    %13 = arith.maximumf %11, %12 : vector<64x128xf32>
    %c0_14 = arith.constant 0 : index
    %c0_15 = arith.constant 0 : index
    %14 = vector.load %arg7[%c0_14, %c0_15] : memref<64x128xf32, #tpu.memory_space<vmem>>, vector<64x128xf32>
    tpu.vector_store %arg7[%c0_14, %c0_15], %13 {strides = array<i32>} : memref<64x128xf32, #tpu.memory_space<vmem>>, vector<64x128xf32>,
    return
  }
  func.func @transform_0(%arg0: i32) -> (i32, i32) {
    %c0_i32 = arith.constant 0 : i32
    %c0_i32_0 = arith.constant 0 : i32
    return %arg0, %c0_i32 : i32, i32
  }
  func.func @transform_1(%arg0: i32) -> (i32, i32) {
    %c0_i32 = arith.constant 0 : i32
    %c0_i32_0 = arith.constant 0 : i32
    %c0_i32_1 = arith.constant 0 : i32
    return %c0_i32, %c0_i32_0 : i32, i32
  }
  func.func @transform_2(%arg0: i32) -> (i32, i32) {
    %c0_i32 = arith.constant 0 : i32
    %c0_i32_0 = arith.constant 0 : i32
    return %arg0, %c0_i32 : i32, i32
  }
  func.func @transform_3(%arg0: i32) -> (i32, i32) {
    %c0_i32 = arith.constant 0 : i32
    %c0_i32_0 = arith.constant 0 : i32
    %c0_i32_1 = arith.constant 0 : i32
    return %c0_i32, %c0_i32_0 : i32, i32
  }
  func.func @transform_4(%arg0: i32) -> (i32, i32) {
    %c0_i32 = arith.constant 0 : i32
    %c0_i32_0 = arith.constant 0 : i32
    %c0_i32_1 = arith.constant 0 : i32
    return %c0_i32, %c0_i32_0 : i32, i32
  }
  func.func @transform_5(%arg0: i32) -> (i32, i32) {
    %c0_i32 = arith.constant 0 : i32
    %c0_i32_0 = arith.constant 0 : i32
    %c0_i32_1 = arith.constant 0 : i32
    return %c0_i32, %c0_i32_0 : i32, i32
  }
  func.func @transform_6(%arg0: i32) -> (i32, i32) {
    %c0_i32 = arith.constant 0 : i32
    %c0_i32_0 = arith.constant 0 : i32
    return %arg0, %c0_i32 : i32, i32
  }
}

</mosaic_0001>

<llo_original>
// kernel: tpu_custom_call.1
$region0: #{tpu_custom_call.1}
  #allocation0 [shape = 'u32[]', space=smem, size = 0x4, offset = 0x4, fixed_abs, tag = 'smem constant byte address 0x4 - core index']
  #allocation1 [shape = 'u32[144,128]{1,0:T(1,128)}', space=vmem, size = 0x12000, scoped, tag = 'internal scratch']
  %s0 = inlined_call_operand.vmem [shape: f32[128,128], index: 0, kind: input, shape index: {}]
  %s1 = inlined_call_operand.vmem [shape: f32[128,8], index: 1, kind: input, shape index: {}]
  %s2 = inlined_call_operand.vmem [shape: f32[128,8], index: 2, kind: input, shape index: {}]
  %s3 = inlined_call_operand.vmem [shape: f32[8,128], index: 3, kind: input, shape index: {}]
  %s4 = inlined_call_operand.vmem [shape: f32[8,128], index: 4, kind: input, shape index: {}]
  %s5 = inlined_call_operand.vmem [shape: f32[1,128], index: 5, kind: input, shape index: {}]
  %s6 = inlined_call_operand.hbm [shape: f32[128,128], index: 6, kind: output, shape index: {}]
  %s7 = sld [smem:[#allocation0]]
  $region57: #{tpu_custom_call.1} parent=0
    _
  %s9 = ssub.s32 1, %s7
  %s10 = scalar_select 0, %s9, %s7
  $region1: #{tpu_custom_call.1} parent=0
    #allocation2 [shape = 'u8[65536]{0}', space=vmem, size = 0x10000, scoped, tag = 'output window, operand 0']
    #allocation3 [shape = 's32[2]{0}', space=sflag, size = 0x8, scoped, tag = 'scoped memory for tpu_custom_call.1']
    %11 = vsyncpa [#allocation3], 0
    %s12 = scalar_lea.sflag [#allocation3], 1
    %13 = vsyncpa %s12, 0
    loop: start=0, step=1, limit=4
    $region2: #{tpu_custom_call.1} parent=1 // loop_pre_header
      _
    $region3: #{tpu_custom_call.1} parent=1 // loop_header
      %s15 = sphi 0, %s19
      %p16 = scmp.ge.s32.totalorder %s15, 4
      %s25 = sphi 0, %s27
      %s28 = sphi 0, %s25
      %s29 = sphi 0, %s28
      %s45 = sphi 0, %s29
      %s49 = sphi 0, %s49
      %s51 = sphi 0, %s49
      %s52 = sphi 0, %s51
      %s66 = sphi 0, %s52
      %s72 = sphi 0, %s74
      %s75 = sphi 0, %s72
      %s76 = sphi 0, %s75
      %s92 = sphi 0, %s76
      %s96 = sphi 0, %s96
      %s98 = sphi 0, %s96
      %s99 = sphi 0, %s98
      %s113 = sphi 0, %s99
      %s117 = sphi 0, %s117
      %s119 = sphi 0, %s117
      %s120 = sphi 0, %s119
      %s134 = sphi 0, %s120
      %s138 = sphi 0, %s138
      %s140 = sphi 0, %s138
      %s141 = sphi 0, %s140
      %s155 = sphi 0, %s141
      %s161 = sphi 0, %s163
      %s164 = sphi 0, %s161
      %s165 = sphi 0, %s164
      %s181 = sphi 0, %s165
    $region4: #{tpu_custom_call.1} parent=1 // loop_header_branch
      %18 = sbr.rel (%p16) target = $region8
    $region5: #{tpu_custom_call.1} parent=1 // loop_body
      %s20 = ssub.s32 %s15, 1
      %s21 = ssub.s32 %s15, 2
      %s22 = sadd.s32 %s15, 1
      %s23 = ssub.s32 %s15, %s22
      %p24 = scmp.eq.s32.totalorder %s23, 0
      %s26 = sadd.s32 %s25, 1
      %s27 = scalar_select %p24, %s25, %s26
      %p30 = pneg %p24
      %p31 = scmp.eq.s32.totalorder %s15, 1
      %p32 = por %p30, %p31
      %p33 = scmp.ne.s32.totalorder %s25, %s28
      %p34 = scmp.eq.s32.totalorder %s15, 0
      %p35 = por %p33, %p34
      %p36 = scmp.ne.s32.totalorder %s25, %s28
      %p37 = scmp.eq.s32.totalorder %s20, 1
      %p38 = por %p36, %p37
      %p39 = scmp.ne.s32.totalorder %s28, %s29
      %p40 = scmp.eq.s32.totalorder %s20, 0
      %p41 = por %p39, %p40
      %p42 = scmp.ne.s32.totalorder %s28, %s29
      %p43 = scmp.eq.s32.totalorder %s21, 1
      %p44 = por %p42, %p43
      %p46 = scmp.ne.s32.totalorder %s29, %s45
      %p47 = scmp.eq.s32.totalorder %s21, 0
      %p48 = por %p46, %p47
      %s50 = sadd.s32 %s49, 1
      %p53 = scmp.eq.s32.totalorder %s15, 1
      %p54 = scmp.ne.s32.totalorder %s49, %s51
      %p55 = scmp.eq.s32.totalorder %s15, 0
      %p56 = por %p54, %p55
      %p57 = scmp.ne.s32.totalorder %s49, %s51
      %p58 = scmp.eq.s32.totalorder %s20, 1
      %p59 = por %p57, %p58
      %p60 = scmp.ne.s32.totalorder %s51, %s52
      %p61 = scmp.eq.s32.totalorder %s20, 0
      %p62 = por %p60, %p61
      %p63 = scmp.ne.s32.totalorder %s51, %s52
      %p64 = scmp.eq.s32.totalorder %s21, 1
      %p65 = por %p63, %p64
      %p67 = scmp.ne.s32.totalorder %s52, %s66
      %p68 = scmp.eq.s32.totalorder %s21, 0
      %p69 = por %p67, %p68
      %s70 = ssub.s32 %s15, %s22
      %p71 = scmp.eq.s32.totalorder %s70, 0
      %s73 = sadd.s32 %s72, 1
      %s74 = scalar_select %p71, %s72, %s73
      %p77 = pneg %p71
      %p78 = scmp.eq.s32.totalorder %s15, 1
      %p79 = por %p77, %p78
      %p80 = scmp.ne.s32.totalorder %s72, %s75
      %p81 = scmp.eq.s32.totalorder %s15, 0
      %p82 = por %p80, %p81
      %p83 = scmp.ne.s32.totalorder %s72, %s75
      %p84 = scmp.eq.s32.totalorder %s20, 1
      %p85 = por %p83, %p84
      %p86 = scmp.ne.s32.totalorder %s75, %s76
      %p87 = scmp.eq.s32.totalorder %s20, 0
      %p88 = por %p86, %p87
      %p89 = scmp.ne.s32.totalorder %s75, %s76
      %p90 = scmp.eq.s32.totalorder %s21, 1
      %p91 = por %p89, %p90
      %p93 = scmp.ne.s32.totalorder %s76, %s92
      %p94 = scmp.eq.s32.totalorder %s21, 0
      %p95 = por %p93, %p94
      %s97 = sadd.s32 %s96, 1
      %p100 = scmp.eq.s32.totalorder %s15, 1
      %p101 = scmp.ne.s32.totalorder %s96, %s98
      %p102 = scmp.eq.s32.totalorder %s15, 0
      %p103 = por %p101, %p102
      %p104 = scmp.ne.s32.totalorder %s96, %s98
      %p105 = scmp.eq.s32.totalorder %s20, 1
      %p106 = por %p104, %p105
      %p107 = scmp.ne.s32.totalorder %s98, %s99
      %p108 = scmp.eq.s32.totalorder %s20, 0
      %p109 = por %p107, %p108
      %p110 = scmp.ne.s32.totalorder %s98, %s99
      %p111 = scmp.eq.s32.totalorder %s21, 1
      %p112 = por %p110, %p111
      %p114 = scmp.ne.s32.totalorder %s99, %s113
      %p115 = scmp.eq.s32.totalorder %s21, 0
      %p116 = por %p114, %p115
      %s118 = sadd.s32 %s117, 1
      %p121 = scmp.eq.s32.totalorder %s15, 1
      %p122 = scmp.ne.s32.totalorder %s117, %s119
      %p123 = scmp.eq.s32.totalorder %s15, 0
      %p124 = por %p122, %p123
      %p125 = scmp.ne.s32.totalorder %s117, %s119
      %p126 = scmp.eq.s32.totalorder %s20, 1
      %p127 = por %p125, %p126
      %p128 = scmp.ne.s32.totalorder %s119, %s120
      %p129 = scmp.eq.s32.totalorder %s20, 0
      %p130 = por %p128, %p129
      %p131 = scmp.ne.s32.totalorder %s119, %s120
      %p132 = scmp.eq.s32.totalorder %s21, 1
      %p133 = por %p131, %p132
      %p135 = scmp.ne.s32.totalorder %s120, %s134
      %p136 = scmp.eq.s32.totalorder %s21, 0
      %p137 = por %p135, %p136
      %s139 = sadd.s32 %s138, 1
      %p142 = scmp.eq.s32.totalorder %s15, 1
      %p143 = scmp.ne.s32.totalorder %s138, %s140
      %p144 = scmp.eq.s32.totalorder %s15, 0
      %p145 = por %p143, %p144
      %p146 = scmp.ne.s32.totalorder %s138, %s140
      %p147 = scmp.eq.s32.totalorder %s20, 1
      %p148 = por %p146, %p147
      %p149 = scmp.ne.s32.totalorder %s140, %s141
      %p150 = scmp.eq.s32.totalorder %s20, 0
      %p151 = por %p149, %p150
      %p152 = scmp.ne.s32.totalorder %s140, %s141
      %p153 = scmp.eq.s32.totalorder %s21, 1
      %p154 = por %p152, %p153
      %p156 = scmp.ne.s32.totalorder %s141, %s155
      %p157 = scmp.eq.s32.totalorder %s21, 0
      %p158 = por %p156, %p157
      %s159 = ssub.s32 %s15, %s22
      %p160 = scmp.eq.s32.totalorder %s159, 0
      %s162 = sadd.s32 %s161, 1
      %s163 = scalar_select %p160, %s161, %s162
      %p166 = pneg %p160
      %p167 = scmp.eq.s32.totalorder %s15, 1
      %p168 = por %p166, %p167
      %p169 = scmp.ne.s32.totalorder %s161, %s164
      %p170 = scmp.eq.s32.totalorder %s15, 0
      %p171 = por %p169, %p170
      %p172 = scmp.ne.s32.totalorder %s161, %s164
      %p173 = scmp.eq.s32.totalorder %s20, 1
      %p174 = por %p172, %p173
      %p175 = scmp.ne.s32.totalorder %s164, %s165
      %p176 = scmp.eq.s32.totalorder %s20, 0
      %p177 = por %p175, %p176
      %p178 = scmp.ne.s32.totalorder %s164, %s165
      %p179 = scmp.eq.s32.totalorder %s21, 1
      %p180 = por %p178, %p179
      %p182 = scmp.ne.s32.totalorder %s165, %s181
      %p183 = scmp.eq.s32.totalorder %s21, 0
      %p184 = por %p182, %p183
      %p185 = scmp.le.s32.totalorder 1, %s15
      %p186 = scmp.lt.s32.totalorder %s15, 3
      %p187 = pnand %p185, %p186
      %p188 = pneg %p187
      // Predicated region
      $region9: #{tpu_custom_call.1} parent=5 // pred_check
        _
      $region10: #{tpu_custom_call.1} parent=5 // pred_check_branch
        %190 = sbr.rel (%p187) target = $region12
      $region11: #{tpu_custom_call.1} parent=5 // pred_region
        %s191 = ssub.s32 %s15, 1
        // Predicated region
        $region13: #{tpu_custom_call.1} parent=11 // pred_check
          %p192 = pneg %p62
        $region14: #{tpu_custom_call.1} parent=11 // pred_check_branch
          %194 = sbr.rel (%p192) target = $region16
        $region15: #{tpu_custom_call.1} parent=11 // pred_region
          _
        $region16: #{tpu_custom_call.1} parent=11 // pred_fallthru
          _
        // Predicated region
        $region17: #{tpu_custom_call.1} parent=11 // pred_check
          %p195 = pneg %p109
        $region18: #{tpu_custom_call.1} parent=11 // pred_check_branch
          %197 = sbr.rel (%p195) target = $region20
        $region19: #{tpu_custom_call.1} parent=11 // pred_region
          _
        $region20: #{tpu_custom_call.1} parent=11 // pred_fallthru
          _
        // Predicated region
        $region21: #{tpu_custom_call.1} parent=11 // pred_check
          %p198 = pneg %p130
        $region22: #{tpu_custom_call.1} parent=11 // pred_check_branch
          %200 = sbr.rel (%p198) target = $region24
        $region23: #{tpu_custom_call.1} parent=11 // pred_region
          _
        $region24: #{tpu_custom_call.1} parent=11 // pred_fallthru
          _
        // Predicated region
        $region25: #{tpu_custom_call.1} parent=11 // pred_check
          %p201 = pneg %p151
        $region26: #{tpu_custom_call.1} parent=11 // pred_check_branch
          %203 = sbr.rel (%p201) target = $region28
        $region27: #{tpu_custom_call.1} parent=11 // pred_region
          _
        $region28: #{tpu_custom_call.1} parent=11 // pred_fallthru
          _
      $region12: #{tpu_custom_call.1} parent=5 // pred_fallthru
        _
      %p204 = scmp.lt.s32.totalorder %s15, 2
      // Predicated region
      $region29: #{tpu_custom_call.1} parent=5 // pred_check
        %p205 = pneg %p204
      $region30: #{tpu_custom_call.1} parent=5 // pred_check_branch
        %207 = sbr.rel (%p205) target = $region32
      $region31: #{tpu_custom_call.1} parent=5 // pred_region
        // Predicated region
        $region33: #{tpu_custom_call.1} parent=31 // pred_check
          %p208 = pneg %p35
        $region34: #{tpu_custom_call.1} parent=31 // pred_check_branch
          %210 = sbr.rel (%p208) target = $region36
        $region35: #{tpu_custom_call.1} parent=31 // pred_region
          %s211 = smul.u32 8, %s15
          %p212 = scmp.lt.s32.totalorder %s211, 15
          %s213 = scalar_select %p212, %s211, 15
          %s214 = smul.addr %s213, 8
          %s215 = scalar_lea.vmem %s0, %s214
          %s216 = smul.u32 8, %s15
        $region36: #{tpu_custom_call.1} parent=31 // pred_fallthru
          _
        // Predicated region
        $region37: #{tpu_custom_call.1} parent=31 // pred_check
          %p217 = pneg %p82
        $region38: #{tpu_custom_call.1} parent=31 // pred_check_branch
          %219 = sbr.rel (%p217) target = $region40
        $region39: #{tpu_custom_call.1} parent=31 // pred_region
          %s220 = smul.u32 8, %s15
          %p221 = scmp.lt.s32.totalorder %s220, 15
          %s222 = scalar_select %p221, %s220, 15
          %s223 = smul.addr %s222, 8
          %s224 = scalar_lea.vmem %s2, %s223
          %s225 = smul.u32 8, %s15
        $region40: #{tpu_custom_call.1} parent=31 // pred_fallthru
          _
      $region32: #{tpu_custom_call.1} parent=5 // pred_fallthru
        _
      %p226 = scmp.le.s32.totalorder 1, %s15
      %p227 = scmp.lt.s32.totalorder %s15, 3
      %p228 = pnand %p226, %p227
      %p229 = pneg %p228
      // Predicated region
      $region41: #{tpu_custom_call.1} parent=5 // pred_check
        _
      $region42: #{tpu_custom_call.1} parent=5 // pred_check_branch
        %231 = sbr.rel (%p228) target = $region44
      $region43: #{tpu_custom_call.1} parent=5 // pred_region
        %s232 = ssub.s32 %s15, 1
        %s233 = smul.u32 8, %s20
        %p234 = scmp.lt.s32.totalorder %s233, 15
        %s235 = scalar_select %p234, %s233, 15
        %s236 = smul.addr %s235, 8
        %s237 = scalar_lea.vmem %s0, %s236
        %p238 = pneg %p41
        %p239 = pneg %p38
        %p240 = pneg %p62
        %p241 = pneg %p59
        %s242 = smul.u32 8, %s20
        %p243 = scmp.lt.s32.totalorder %s242, 15
        %s244 = scalar_select %p243, %s242, 15
        %s245 = smul.addr %s244, 8
        %s246 = scalar_lea.vmem %s2, %s245
        %p247 = pneg %p88
        %p248 = pneg %p85
        %p249 = pneg %p109
        %p250 = pneg %p106
        %p251 = pneg %p130
        %p252 = pneg %p127
        %p253 = pneg %p151
        %p254 = pneg %p148
        %p255 = pneg %p177
        %p256 = pneg %p174
        %s257 = sand.u32 %s164, 1
        %s258 = scalar_lea.sflag [#allocation3], %s257
        %s259 = sand.u32 %s164, 1
        %s260 = smul.addr %s259, 64
        %s261 = scalar_lea.vmem [#allocation2], %s260
        %s262 = smul.u32 8, %s20
        %p263 = scmp.lt.s32.totalorder %s262, 15
        %s264 = scalar_select %p263, %s262, 15
        %s265 = smul.addr %s264, 8
        %s266 = scalar_lea.vmem %s0, %s265
        %s267 = smul.u32 8, %s20
        %s268 = smul.u32 8, %s20
        %p269 = scmp.lt.s32.totalorder %s268, 15
        %s270 = scalar_select %p269, %s268, 15
        %s271 = smul.addr %s270, 8
        %s272 = scalar_lea.vmem %s2, %s271
        %s273 = smul.u32 8, %s20
        %s274 = smul.u32 8, %s20
        %v275 = vld [vmem:[%s266] sm:$0xff]
        %v276 = vld [vmem:[%s266 + $0x8] sm:$0xff]
        %v277 = vld [vmem:[%s266 + $0x10] sm:$0xff]
        %v278 = vld [vmem:[%s266 + $0x18] sm:$0xff]
        %v279 = vld [vmem:[%s266 + $0x20] sm:$0xff]
        %v280 = vld [vmem:[%s266 + $0x28] sm:$0xff]
        %v281 = vld [vmem:[%s266 + $0x30] sm:$0xff]
        %v282 = vld [vmem:[%s266 + $0x38] sm:$0xff]
        %v283 = vld [vmem:[%s1] sm:$0xff]
        %v284 = vld [vmem:[%s1 + $0x8] sm:$0xff]
        %v285 = vld [vmem:[%s1 + $0x10] sm:$0xff]
        %v286 = vld [vmem:[%s1 + $0x18] sm:$0xff]
        %v287 = vld [vmem:[%s1 + $0x20] sm:$0xff]
        %v288 = vld [vmem:[%s1 + $0x28] sm:$0xff]
        %v289 = vld [vmem:[%s1 + $0x30] sm:$0xff]
        %v290 = vld [vmem:[%s1 + $0x38] sm:$0xff]
        %v291 = vld [vmem:[%s1 + $0x40] sm:$0xff]
        %v292 = vld [vmem:[%s1 + $0x48] sm:$0xff]
        %v293 = vld [vmem:[%s1 + $0x50] sm:$0xff]
        %v294 = vld [vmem:[%s1 + $0x58] sm:$0xff]
        %v295 = vld [vmem:[%s1 + $0x60] sm:$0xff]
        %v296 = vld [vmem:[%s1 + $0x68] sm:$0xff]
        %v297 = vld [vmem:[%s1 + $0x70] sm:$0xff]
        %v298 = vld [vmem:[%s1 + $0x78] sm:$0xff]
        %299 = vmatprep.subr.mxu0 0.0
        %300 = vmatpush1.msra.mxu0 %v298
        %301 = vmatprep.subr.mxu0 0.0
        %302 = vmatpush1.msra.mxu0 %v297
        %303 = vmatprep.subr.mxu0 0.0
        %304 = vmatpush1.msra.mxu0 %v296
        %305 = vmatprep.subr.mxu0 0.0
        %306 = vmatpush1.msra.mxu0 %v295
        %307 = vmatprep.subr.mxu0 0.0
        %308 = vmatpush1.msra.mxu0 %v294
        %309 = vmatprep.subr.mxu0 0.0
        %310 = vmatpush1.msra.mxu0 %v293
        %311 = vmatprep.subr.mxu0 0.0
        %312 = vmatpush1.msra.mxu0 %v292
        %313 = vmatprep.subr.mxu0 0.0
        %314 = vmatpush1.msra.mxu0 %v291
        %315 = vmatprep.subr.mxu0 0.0
        %316 = vmatpush1.msra.mxu0 %v290
        %317 = vmatprep.subr.mxu0 0.0
        %318 = vmatpush1.msra.mxu0 %v289
        %319 = vmatprep.subr.mxu0 0.0
        %320 = vmatpush1.msra.mxu0 %v288
        %321 = vmatprep.subr.mxu0 0.0
        %322 = vmatpush1.msra.mxu0 %v287
        %323 = vmatprep.subr.mxu0 0.0
        %324 = vmatpush1.msra.mxu0 %v286
        %325 = vmatprep.subr.mxu0 0.0
        %326 = vmatpush1.msra.mxu0 %v285
        %327 = vmatprep.subr.mxu0 0.0
        %328 = vmatpush1.msra.mxu0 %v284
        %329 = vmatprep.subr.mxu0 0.0
        %330 = vmatpush1.msra.mxu0 %v283
        %331 = vmatprep.subr.mxu0 0.0
        %332 = vmatpush2.msra.mxu0 0.0
        %333 = vmatprep.subr.mxu0 0.0
        %334 = vmatpush2.msra.mxu0 0.0
        %335 = vmatprep.subr.mxu0 0.0
        %336 = vmatpush2.msra.mxu0 0.0
        %337 = vmatprep.subr.mxu0 0.0
        %338 = vmatpush2.msra.mxu0 0.0
        %339 = vmatprep.subr.mxu0 0.0
        %340 = vmatpush2.msra.mxu0 0.0
        %341 = vmatprep.subr.mxu0 0.0
        %342 = vmatpush2.msra.mxu0 0.0
        %343 = vmatprep.subr.mxu0 0.0
        %344 = vmatpush2.msra.mxu0 0.0
        %345 = vmatprep.subr.mxu0 0.0
        %346 = vmatpush2.msra.mxu0 0.0
        %347 = vmatprep.subr.mxu0 0.0
        %348 = vmatpush2.msra.mxu0 0.0
        %349 = vmatprep.subr.mxu0 0.0
        %350 = vmatpush2.msra.mxu0 0.0
        %351 = vmatprep.subr.mxu0 0.0
        %352 = vmatpush2.msra.mxu0 0.0
        %353 = vmatprep.subr.mxu0 0.0
        %354 = vmatpush2.msra.mxu0 0.0
        %355 = vmatprep.subr.mxu0 0.0
        %356 = vmatpush2.msra.mxu0 0.0
        %357 = vmatprep.subr.mxu0 0.0
        %358 = vmatpush2.msra.mxu0 0.0
        %359 = vmatprep.subr.mxu0 0.0
        %360 = vmatpush2.msra.mxu0 0.0
        %361 = vmatprep.subr.mxu0 0.0
        %362 = vmatpush2.msra.mxu0 0.0
        %363 = vmatprep.mubr.f32.mxu0 0.0
        %364 = vmatmul.mubr.f32.gmra.mxu0 %v275
        %v365 = vpop.f32.mrf.mxu0
        %v366 = vadd.f32 0.0, %v365
        %v367 = vpop.f32.mrf.mxu0
        %368 = vmatprep.mubr.f32.mxu0 0.0
        %369 = vmatmul.mubr.f32.gmra.mxu0 %v276
        %v370 = vpop.f32.mrf.mxu0
        %v371 = vadd.f32 0.0, %v370
        %v372 = vpop.f32.mrf.mxu0
        %373 = vmatprep.mubr.f32.mxu0 0.0
        %374 = vmatmul.mubr.f32.gmra.mxu0 %v277
        %v375 = vpop.f32.mrf.mxu0
        %v376 = vadd.f32 0.0, %v375
        %v377 = vpop.f32.mrf.mxu0
        %378 = vmatprep.mubr.f32.mxu0 0.0
        %379 = vmatmul.mubr.f32.gmra.mxu0 %v278
        %v380 = vpop.f32.mrf.mxu0
        %v381 = vadd.f32 0.0, %v380
        %v382 = vpop.f32.mrf.mxu0
        %383 = vmatprep.mubr.f32.mxu0 0.0
        %384 = vmatmul.mubr.f32.gmra.mxu0 %v279
        %v385 = vpop.f32.mrf.mxu0
        %v386 = vadd.f32 0.0, %v385
        %v387 = vpop.f32.mrf.mxu0
        %388 = vmatprep.mubr.f32.mxu0 0.0
        %389 = vmatmul.mubr.f32.gmra.mxu0 %v280
        %v390 = vpop.f32.mrf.mxu0
        %v391 = vadd.f32 0.0, %v390
        %v392 = vpop.f32.mrf.mxu0
        %393 = vmatprep.mubr.f32.mxu0 0.0
        %394 = vmatmul.mubr.f32.gmra.mxu0 %v281
        %v395 = vpop.f32.mrf.mxu0
        %v396 = vadd.f32 0.0, %v395
        %v397 = vpop.f32.mrf.mxu0
        %398 = vmatprep.mubr.f32.mxu0 0.0
        %399 = vmatmul.mubr.f32.gmra.mxu0 %v282
        %v400 = vpop.f32.mrf.mxu0
        %v401 = vadd.f32 0.0, %v400
        %v402 = vpop.f32.mrf.mxu0
        %403 = vdwg.mxu0
        %v404 = vld [vmem:[%s3] sm:$0xff]
        %v405 = vld [vmem:[%s272] sm:$0xff]
        %v406 = vld [vmem:[%s272 + $0x8] sm:$0xff]
        %v407 = vld [vmem:[%s272 + $0x10] sm:$0xff]
        %v408 = vld [vmem:[%s272 + $0x18] sm:$0xff]
        %v409 = vld [vmem:[%s272 + $0x20] sm:$0xff]
        %v410 = vld [vmem:[%s272 + $0x28] sm:$0xff]
        %v411 = vld [vmem:[%s272 + $0x30] sm:$0xff]
        %v412 = vld [vmem:[%s272 + $0x38] sm:$0xff]
        %v413 = vld [vmem:[%s4] sm:$0xff]
        %vm414 = vcmask 64512
        %v416 = vsel %vm414, %v405, 0
        %v419 = vsel %vm414, %v406, 0
        %v422 = vsel %vm414, %v407, 0
        %v425 = vsel %vm414, %v408, 0
        %v428 = vsel %vm414, %v409, 0
        %v431 = vsel %vm414, %v410, 0
        %v434 = vsel %vm414, %v411, 0
        %v437 = vsel %vm414, %v412, 0
        %439 = vmatprep.subr.mxu0 0.0
        %440 = vmatpush1.msra.mxu0 0.0
        %441 = vmatprep.subr.mxu0 0.0
        %442 = vmatpush1.msra.mxu0 0.0
        %443 = vmatprep.subr.mxu0 0.0
        %444 = vmatpush1.msra.mxu0 0.0
        %445 = vmatprep.subr.mxu0 0.0
        %446 = vmatpush1.msra.mxu0 0.0
        %447 = vmatprep.subr.mxu0 0.0
        %448 = vmatpush1.msra.mxu0 0.0
        %449 = vmatprep.subr.mxu0 0.0
        %450 = vmatpush1.msra.mxu0 0.0
        %451 = vmatprep.subr.mxu0 0.0
        %452 = vmatpush1.msra.mxu0 0.0
        %453 = vmatprep.subr.mxu0 0.0
        %454 = vmatpush1.msra.mxu0 0.0
        %455 = vmatprep.subr.mxu0 0.0
        %456 = vmatpush1.msra.mxu0 0.0
        %457 = vmatprep.subr.mxu0 0.0
        %458 = vmatpush1.msra.mxu0 0.0
        %459 = vmatprep.subr.mxu0 0.0
        %460 = vmatpush1.msra.mxu0 0.0
        %461 = vmatprep.subr.mxu0 0.0
        %462 = vmatpush1.msra.mxu0 0.0
        %463 = vmatprep.subr.mxu0 0.0
        %464 = vmatpush1.msra.mxu0 0.0
        %465 = vmatprep.subr.mxu0 0.0
        %466 = vmatpush1.msra.mxu0 0.0
        %467 = vmatprep.subr.mxu0 0.0
        %468 = vmatpush1.msra.mxu0 0.0
        %469 = vmatprep.subr.mxu0 0.0
        %470 = vmatpush1.msra.mxu0 %v413
        %471 = vmatprep.subr.mxu0 0.0
        %472 = vmatpush2.msra.mxu0 0.0
        %473 = vmatprep.subr.mxu0 0.0
        %474 = vmatpush2.msra.mxu0 0.0
        %475 = vmatprep.subr.mxu0 0.0
        %476 = vmatpush2.msra.mxu0 0.0
        %477 = vmatprep.subr.mxu0 0.0
        %478 = vmatpush2.msra.mxu0 0.0
        %479 = vmatprep.subr.mxu0 0.0
        %480 = vmatpush2.msra.mxu0 0.0
        %481 = vmatprep.subr.mxu0 0.0
        %482 = vmatpush2.msra.mxu0 0.0
        %483 = vmatprep.subr.mxu0 0.0
        %484 = vmatpush2.msra.mxu0 0.0
        %485 = vmatprep.subr.mxu0 0.0
        %486 = vmatpush2.msra.mxu0 0.0
        %487 = vmatprep.subr.mxu0 0.0
        %488 = vmatpush2.msra.mxu0 0.0
        %489 = vmatprep.subr.mxu0 0.0
        %490 = vmatpush2.msra.mxu0 0.0
        %491 = vmatprep.subr.mxu0 0.0
        %492 = vmatpush2.msra.mxu0 0.0
        %493 = vmatprep.subr.mxu0 0.0
        %494 = vmatpush2.msra.mxu0 0.0
        %495 = vmatprep.subr.mxu0 0.0
        %496 = vmatpush2.msra.mxu0 0.0
        %497 = vmatprep.subr.mxu0 0.0
        %498 = vmatpush2.msra.mxu0 0.0
        %499 = vmatprep.subr.mxu0 0.0
        %500 = vmatpush2.msra.mxu0 0.0
        %501 = vmatprep.subr.mxu0 0.0
        %502 = vmatpush2.msra.mxu0 0.0
        %503 = vmatprep.mubr.f32.mxu0 0.0
        %504 = vmatmul.mubr.f32.gmra.mxu0 %v416
        %v505 = vpop.f32.mrf.mxu0
        %v506 = vadd.f32 0.0, %v505
        %v507 = vpop.f32.mrf.mxu0
        %508 = vmatprep.mubr.f32.mxu0 0.0
        %509 = vmatmul.mubr.f32.gmra.mxu0 %v419
        %v510 = vpop.f32.mrf.mxu0
        %v511 = vadd.f32 0.0, %v510
        %v512 = vpop.f32.mrf.mxu0
        %513 = vmatprep.mubr.f32.mxu0 0.0
        %514 = vmatmul.mubr.f32.gmra.mxu0 %v422
        %v515 = vpop.f32.mrf.mxu0
        %v516 = vadd.f32 0.0, %v515
        %v517 = vpop.f32.mrf.mxu0
        %518 = vmatprep.mubr.f32.mxu0 0.0
        %519 = vmatmul.mubr.f32.gmra.mxu0 %v425
        %v520 = vpop.f32.mrf.mxu0
        %v521 = vadd.f32 0.0, %v520
        %v522 = vpop.f32.mrf.mxu0
        %523 = vmatprep.mubr.f32.mxu0 0.0
        %524 = vmatmul.mubr.f32.gmra.mxu0 %v428
        %v525 = vpop.f32.mrf.mxu0
        %v526 = vadd.f32 0.0, %v525
        %v527 = vpop.f32.mrf.mxu0
        %528 = vmatprep.mubr.f32.mxu0 0.0
        %529 = vmatmul.mubr.f32.gmra.mxu0 %v431
        %v530 = vpop.f32.mrf.mxu0
        %v531 = vadd.f32 0.0, %v530
        %v532 = vpop.f32.mrf.mxu0
        %533 = vmatprep.mubr.f32.mxu0 0.0
        %534 = vmatmul.mubr.f32.gmra.mxu0 %v434
        %v535 = vpop.f32.mrf.mxu0
        %v536 = vadd.f32 0.0, %v535
        %v537 = vpop.f32.mrf.mxu0
        %538 = vmatprep.mubr.f32.mxu0 0.0
        %539 = vmatmul.mubr.f32.gmra.mxu0 %v437
        %v540 = vpop.f32.mrf.mxu0
        %v541 = vadd.f32 0.0, %v540
        %v542 = vpop.f32.mrf.mxu0
        %543 = vdwg.mxu0
        %v545 = vsel %vm414, %v366, 0
        %v548 = vsel %vm414, %v371, 0
        %v551 = vsel %vm414, %v376, 0
        %v554 = vsel %vm414, %v381, 0
        %v557 = vsel %vm414, %v386, 0
        %v560 = vsel %vm414, %v391, 0
        %v563 = vsel %vm414, %v396, 0
        %v566 = vsel %vm414, %v401, 0
        %568 = vmatprep.subr.mxu0 0.0
        %569 = vmatpush1.msra.mxu0 0.0
        %570 = vmatprep.subr.mxu0 0.0
        %571 = vmatpush1.msra.mxu0 0.0
        %572 = vmatprep.subr.mxu0 0.0
        %573 = vmatpush1.msra.mxu0 0.0
        %574 = vmatprep.subr.mxu0 0.0
        %575 = vmatpush1.msra.mxu0 0.0
        %576 = vmatprep.subr.mxu0 0.0
        %577 = vmatpush1.msra.mxu0 0.0
        %578 = vmatprep.subr.mxu0 0.0
        %579 = vmatpush1.msra.mxu0 0.0
        %580 = vmatprep.subr.mxu0 0.0
        %581 = vmatpush1.msra.mxu0 0.0
        %582 = vmatprep.subr.mxu0 0.0
        %583 = vmatpush1.msra.mxu0 0.0
        %584 = vmatprep.subr.mxu0 0.0
        %585 = vmatpush1.msra.mxu0 0.0
        %586 = vmatprep.subr.mxu0 0.0
        %587 = vmatpush1.msra.mxu0 0.0
        %588 = vmatprep.subr.mxu0 0.0
        %589 = vmatpush1.msra.mxu0 0.0
        %590 = vmatprep.subr.mxu0 0.0
        %591 = vmatpush1.msra.mxu0 0.0
        %592 = vmatprep.subr.mxu0 0.0
        %593 = vmatpush1.msra.mxu0 0.0
        %594 = vmatprep.subr.mxu0 0.0
        %595 = vmatpush1.msra.mxu0 0.0
        %596 = vmatprep.subr.mxu0 0.0
        %597 = vmatpush1.msra.mxu0 0.0
        %598 = vmatprep.subr.mxu0 0.0
        %599 = vmatpush1.msra.mxu0 %v404
        %600 = vmatprep.subr.mxu0 0.0
        %601 = vmatpush2.msra.mxu0 0.0
        %602 = vmatprep.subr.mxu0 0.0
        %603 = vmatpush2.msra.mxu0 0.0
        %604 = vmatprep.subr.mxu0 0.0
        %605 = vmatpush2.msra.mxu0 0.0
        %606 = vmatprep.subr.mxu0 0.0
        %607 = vmatpush2.msra.mxu0 0.0
        %608 = vmatprep.subr.mxu0 0.0
        %609 = vmatpush2.msra.mxu0 0.0
        %610 = vmatprep.subr.mxu0 0.0
        %611 = vmatpush2.msra.mxu0 0.0
        %612 = vmatprep.subr.mxu0 0.0
        %613 = vmatpush2.msra.mxu0 0.0
        %614 = vmatprep.subr.mxu0 0.0
        %615 = vmatpush2.msra.mxu0 0.0
        %616 = vmatprep.subr.mxu0 0.0
        %617 = vmatpush2.msra.mxu0 0.0
        %618 = vmatprep.subr.mxu0 0.0
        %619 = vmatpush2.msra.mxu0 0.0
        %620 = vmatprep.subr.mxu0 0.0
        %621 = vmatpush2.msra.mxu0 0.0
        %622 = vmatprep.subr.mxu0 0.0
        %623 = vmatpush2.msra.mxu0 0.0
        %624 = vmatprep.subr.mxu0 0.0
        %625 = vmatpush2.msra.mxu0 0.0
        %626 = vmatprep.subr.mxu0 0.0
        %627 = vmatpush2.msra.mxu0 0.0
        %628 = vmatprep.subr.mxu0 0.0
        %629 = vmatpush2.msra.mxu0 0.0
        %630 = vmatprep.subr.mxu0 0.0
        %631 = vmatpush2.msra.mxu0 0.0
        %632 = vmatprep.mubr.f32.mxu0 0.0
        %633 = vmatmul.mubr.f32.gmra.mxu0 %v545
        %v634 = vpop.f32.mrf.mxu0
        %v635 = vadd.f32 %v506, %v634
        %v636 = vpop.f32.mrf.mxu0
        %637 = vmatprep.mubr.f32.mxu0 0.0
        %638 = vmatmul.mubr.f32.gmra.mxu0 %v548
        %v639 = vpop.f32.mrf.mxu0
        %v640 = vadd.f32 %v511, %v639
        %v641 = vpop.f32.mrf.mxu0
        %642 = vmatprep.mubr.f32.mxu0 0.0
        %643 = vmatmul.mubr.f32.gmra.mxu0 %v551
        %v644 = vpop.f32.mrf.mxu0
        %v645 = vadd.f32 %v516, %v644
        %v646 = vpop.f32.mrf.mxu0
        %647 = vmatprep.mubr.f32.mxu0 0.0
        %648 = vmatmul.mubr.f32.gmra.mxu0 %v554
        %v649 = vpop.f32.mrf.mxu0
        %v650 = vadd.f32 %v521, %v649
        %v651 = vpop.f32.mrf.mxu0
        %652 = vmatprep.mubr.f32.mxu0 0.0
        %653 = vmatmul.mubr.f32.gmra.mxu0 %v557
        %v654 = vpop.f32.mrf.mxu0
        %v655 = vadd.f32 %v526, %v654
        %v656 = vpop.f32.mrf.mxu0
        %657 = vmatprep.mubr.f32.mxu0 0.0
        %658 = vmatmul.mubr.f32.gmra.mxu0 %v560
        %v659 = vpop.f32.mrf.mxu0
        %v660 = vadd.f32 %v531, %v659
        %v661 = vpop.f32.mrf.mxu0
        %662 = vmatprep.mubr.f32.mxu0 0.0
        %663 = vmatmul.mubr.f32.gmra.mxu0 %v563
        %v664 = vpop.f32.mrf.mxu0
        %v665 = vadd.f32 %v536, %v664
        %v666 = vpop.f32.mrf.mxu0
        %667 = vmatprep.mubr.f32.mxu0 0.0
        %668 = vmatmul.mubr.f32.gmra.mxu0 %v566
        %v669 = vpop.f32.mrf.mxu0
        %v670 = vadd.f32 %v541, %v669
        %v671 = vpop.f32.mrf.mxu0
        %672 = vdwg.mxu0
        %v673 = vld [vmem:[%s5] sm:$0x1]
        %v675 = vlaneseq
        %v676 = vshrl.u32 %v675, 7
        %v677 = vsub.s32 0, %v676
        %v678 = vrot.slane %v673, %v677
        %v680 = vadd.f32 %v635, %v678
        %v681 = vadd.f32 %v640, %v678
        %v682 = vadd.f32 %v645, %v678
        %v683 = vadd.f32 %v650, %v678
        %v684 = vadd.f32 %v655, %v678
        %v685 = vadd.f32 %v660, %v678
        %v686 = vadd.f32 %v665, %v678
        %v687 = vadd.f32 %v670, %v678
        %v688 = vmax.f32 %v680, 0.0
        %v689 = vmax.f32 %v681, 0.0
        %v690 = vmax.f32 %v682, 0.0
        %v691 = vmax.f32 %v683, 0.0
        %v692 = vmax.f32 %v684, 0.0
        %v693 = vmax.f32 %v685, 0.0
        %v694 = vmax.f32 %v686, 0.0
        %v695 = vmax.f32 %v687, 0.0
        %696 = vst [vmem:[%s261] sm:$0xff] %v688
        %697 = vst [vmem:[%s261 + $0x8] sm:$0xff] %v689
        %698 = vst [vmem:[%s261 + $0x10] sm:$0xff] %v690
        %699 = vst [vmem:[%s261 + $0x18] sm:$0xff] %v691
        %700 = vst [vmem:[%s261 + $0x20] sm:$0xff] %v692
        %701 = vst [vmem:[%s261 + $0x28] sm:$0xff] %v693
        %702 = vst [vmem:[%s261 + $0x30] sm:$0xff] %v694
        %703 = vst [vmem:[%s261 + $0x38] sm:$0xff] %v695
        %s704 = sand.u32 %s164, 1
        %s705 = scalar_lea.sflag [#allocation3], %s704
        %s706 = sand.u32 %s164, 1
        %s707 = smul.addr %s706, 64
        %s708 = scalar_lea.vmem [#allocation2], %s707
        // Predicated region
        $region45: #{tpu_custom_call.1} parent=43 // pred_check
          %p709 = pneg %p174
        $region46: #{tpu_custom_call.1} parent=43 // pred_check_branch
          %711 = sbr.rel (%p709) target = $region48
        $region47: #{tpu_custom_call.1} parent=43 // pred_region
          %s712 = smul.u32 8, %s20
          %s714 = ssub.s32 1024, 1024
          %715 = vsyncadd %s705, %s714
          %s716 = smul.addr %s712, 128
          %s717 = scalar_lea.hbm %s6, %s716
          %s718 = sshll.u32 %s708, 4
          %s719 = int_to_ptr.vmem [resolvable:$true] %s718
          %724 = dma.vmem_to_hbm [thread:$0]  %s719, 1024, %s717, %s705, 128, 128, 8
        $region48: #{tpu_custom_call.1} parent=43 // pred_fallthru
          _
      $region44: #{tpu_custom_call.1} parent=5 // pred_fallthru
        _
      %p725 = scmp.le.s32.totalorder 2, %s15
      // Predicated region
      $region49: #{tpu_custom_call.1} parent=5 // pred_check
        %p726 = pneg %p725
      $region50: #{tpu_custom_call.1} parent=5 // pred_check_branch
        %728 = sbr.rel (%p726) target = $region52
      $region51: #{tpu_custom_call.1} parent=5 // pred_region
        %s729 = ssub.s32 %s15, 2
        // Predicated region
        $region53: #{tpu_custom_call.1} parent=51 // pred_check
          %p730 = pneg %p180
        $region54: #{tpu_custom_call.1} parent=51 // pred_check_branch
          %732 = sbr.rel (%p730) target = $region56
        $region55: #{tpu_custom_call.1} parent=51 // pred_region
          %s733 = sand.u32 %s165, 1
          %s734 = scalar_lea.sflag [#allocation3], %s733
          %s735 = sand.u32 %s165, 1
          %s736 = smul.addr %s735, 64
          %s737 = scalar_lea.vmem [#allocation2], %s736
          %738 = dma.done %s734, 1024
        $region56: #{tpu_custom_call.1} parent=51 // pred_fallthru
          _
      $region52: #{tpu_custom_call.1} parent=5 // pred_fallthru
        _
    $region6: #{tpu_custom_call.1} parent=1 // loop_footer
      %s19 = sadd.s32 1, %s15
    $region7: #{tpu_custom_call.1} parent=1 // loop_footer_branch
      %14 = sbr.rel target = $region3
    $region8: #{tpu_custom_call.1} parent=1 // loop_exit
      _
    %739 = vsyncpa [#allocation3], 1
    %s740 = scalar_lea.sflag [#allocation3], 1
    %741 = vsyncpa %s740, 1

</llo_original>
